<compile_context>
chip_gen: v7x
topology: tpu7x:2x2x1
jax: 0.10.0
libtpu: 0.0.40
codegen_flags: <defaults>
</compile_context>

<pallas_src>
import math
import jax
import jax.numpy as jnp
from jax.experimental import pallas as pl
from jax.experimental.pallas import tpu as pltpu

KSIZE = 3
PAD = 2  # (kernel_size - 1) * dilation


def _tcn_kernel(x_ref, w1_ref, b1_ref, w2_ref, b2_ref, o_ref):
    # x_ref:  (Bt, L,  D_in)   bf16, unpadded
    # w1_ref: (K*D_in, H)      bf16, im2col layout
    # b1_ref: (1, H)           f32
    # w2_ref: (K*H, H)         bf16, im2col layout
    # b2_ref: (1, H)           f32
    # o_ref:  (Bt, L2, H)      f32,  L2 = L + 4
    Bt, L, Din = x_ref.shape
    H = o_ref.shape[2]
    L1 = L + PAD          # conv1 output length
    L2 = L1 + PAD         # conv2 output length

    w1 = w1_ref[...]
    w2 = w2_ref[...]
    b1 = b1_ref[...]
    b2 = b2_ref[...]

    for b in range(Bt):   # static unroll over the (small) batch tile
        x = x_ref[b]                                           # (L, Din) bf16
        z_in = jnp.zeros((PAD, Din), x.dtype)
        xp = jnp.concatenate([z_in, x, z_in], axis=0)          # (L+2P, Din)

        # ---- conv1 as a single deep matmul (im2col over taps) + bias + relu ----
        cols1 = jnp.concatenate([xp[k:k + L1, :] for k in range(KSIZE)], axis=1)
        h = jnp.dot(cols1, w1, preferred_element_type=jnp.float32) + b1
        h = jnp.maximum(h, 0.0)                                # dropout = identity (inference)
        h = h.astype(w2.dtype)                                 # (L1, H) bf16

        # ---- conv2 as a single deep matmul + bias ----
        z_h = jnp.zeros((PAD, H), h.dtype)
        hp = jnp.concatenate([z_h, h, z_h], axis=0)            # (L1+2P, H)
        cols2 = jnp.concatenate([hp[k:k + L2, :] for k in range(KSIZE)], axis=1)
        y = jnp.dot(cols2, w2, preferred_element_type=jnp.float32) + b2

        o_ref[b] = y.astype(o_ref.dtype)


def prepare_tcn_params(w1, b1, w2, b2):
    """One-time parameter preparation (hoisted out of the forward path).

    Torch Conv1d layout (C_out, C_in, K) -> im2col layout (K*C_in, C_out), bf16.
    Column index in the kernel's im2col activation is k*C_in + c, matching
    row index k*C_in + c here: w_col[k*C_in + c, h] = w[h, c, k].
    """
    H, Din, K = w1.shape
    w1_col = jnp.transpose(w1, (2, 1, 0)).reshape(K * Din, H).astype(jnp.bfloat16)
    w2_col = jnp.transpose(w2, (2, 1, 0)).reshape(K * H, H).astype(jnp.bfloat16)
    b1_2d = b1.reshape(1, H).astype(jnp.float32)
    b2_2d = b2.reshape(1, H).astype(jnp.float32)
    return w1_col, b1_2d, w2_col, b2_2d


def _choose_batch_tile(B, max_bt=8):
    """Batch rows per grid step: amortize grid overhead but keep >=2 parallel
    grid steps when B >= 2 so both v7x TensorCores get work."""
    if B <= 1:
        return 1
    return max(1, min(max_bt, pl.cdiv(B, 2)))


def tcn_embedding_forward(x, params, *, batch_tile=None):
    """x: (B, L, D_in) channels-last; params from prepare_tcn_params.
    Returns (y, n_vars) with y: (B, L+4, H) float32."""
    w1_col, b1_2d, w2_col, b2_2d = params
    B, L, Din = x.shape
    H = w1_col.shape[1]
    L2 = L + 2 * PAD

    bt = _choose_batch_tile(B) if batch_tile is None else batch_tile
    nb = pl.cdiv(B, bt)
    Bp = nb * bt

    x_in = x.astype(jnp.bfloat16)
    if Bp != B:  # pad ragged batch tail with zero rows, sliced off below
        x_in = jnp.pad(x_in, ((0, Bp - B), (0, 0), (0, 0)))

    y = pl.pallas_call(
        _tcn_kernel,
        out_shape=jax.ShapeDtypeStruct((Bp, L2, H), jnp.float32),
        grid=(nb,),
        in_specs=[
            pl.BlockSpec((bt, L, Din), lambda i: (i, 0, 0)),
            pl.BlockSpec((KSIZE * Din, H), lambda i: (0, 0)),
            pl.BlockSpec((1, H), lambda i: (0, 0)),
            pl.BlockSpec((KSIZE * H, H), lambda i: (0, 0)),
            pl.BlockSpec((1, H), lambda i: (0, 0)),
        ],
        out_specs=pl.BlockSpec((bt, L2, H), lambda i: (i, 0, 0)),
        compiler_params=pltpu.CompilerParams(
            dimension_semantics=("parallel",)),
    )(x_in, w1_col, b1_2d, w2_col, b2_2d)

    if Bp != B:
        y = y[:B]
    n_vars = 1
    return y, n_vars


def _reference_forward(x, w1, b1, w2, b2):
    """Plain-JAX reference matching torch Conv1d semantics (channels-last view),
    mirroring the kernel's bf16 rounding of matmul inputs (f32 accumulation)."""
    f32 = jnp.float32
    x = x.astype(jnp.bfloat16).astype(f32)
    w1 = w1.astype(jnp.bfloat16).astype(f32)
    w2 = w2.astype(jnp.bfloat16).astype(f32)
    B, L, Din = x.shape
    H = w1.shape[0]
    L1 = L + PAD
    L2 = L1 + PAD
    xp = jnp.pad(x, ((0, 0), (PAD, PAD), (0, 0)))
    h = b1[None, None, :].astype(f32)
    for k in range(KSIZE):
        h = h + jnp.einsum('btd,dh->bth', xp[:, k:k + L1, :], w1[:, :, k].T)
    h = jnp.maximum(h, 0.0)
    h = h.astype(jnp.bfloat16).astype(f32)
    hp = jnp.pad(h, ((0, 0), (PAD, PAD), (0, 0)))
    y = b2[None, None, :].astype(f32)
    for k in range(KSIZE):
        y = y + jnp.einsum('bth,hg->btg', hp[:, k:k + L2, :], w2[:, :, k].T)
    return y


if __name__ == "__main__":
    B, L = 2, 8
    input_size, hidden_size = 4, 32

    key = jax.random.PRNGKey(0)
    k1, k2, k3, k4, k5 = jax.random.split(key, 5)

    # Deterministic init mimicking torch Conv1d default (U(-bound, bound), bound=1/sqrt(fan_in)).
    bound1 = 1.0 / math.sqrt(input_size * KSIZE)
    bound2 = 1.0 / math.sqrt(hidden_size * KSIZE)
    w1 = jax.random.uniform(k1, (hidden_size, input_size, KSIZE), jnp.float32,
                            -bound1, bound1)
    b1 = jax.random.uniform(k2, (hidden_size,), jnp.float32, -bound1, bound1)
    w2 = jax.random.uniform(k3, (hidden_size, hidden_size, KSIZE), jnp.float32,
                            -bound2, bound2)
    b2 = jax.random.uniform(k4, (hidden_size,), jnp.float32, -bound2, bound2)

    x = jax.random.normal(k5, (B, L, input_size), jnp.float32)

    params = prepare_tcn_params(w1, b1, w2, b2)   # one-time weight prep (im2col + bf16)
    y, n_vars = tcn_embedding_forward(x, params)
    y = jax.block_until_ready(y)

    y_ref = _reference_forward(x, w1, b1, w2, b2)
    assert y.shape == (B, L + 4, hidden_size)
    assert n_vars == 1
    assert jnp.allclose(y, y_ref, atol=1e-2, rtol=1e-2), "mismatch vs reference"

    print("KERNEL_OK")
</pallas_src>

<mosaic_0001>
module attributes {stable_mosaic.version = 11 : i64} {
  func.func @_tcn_kernel(%arg0: i32, %arg1: memref<1x8x4xbf16, #tpu.memory_space<vmem>>, %arg2: memref<12x32xbf16, #tpu.memory_space<vmem>>, %arg3: memref<1x32xf32, #tpu.memory_space<vmem>>, %arg4: memref<96x32xbf16, #tpu.memory_space<vmem>>, %arg5: memref<1x32xf32, #tpu.memory_space<vmem>>, %arg6: memref<1x12x32xf32, #tpu.memory_space<vmem>>) attributes {dimension_semantics = [#tpu.dimension_semantics<parallel>], iteration_bounds = array<i64: 2>, scalar_prefetch = 0 : i64, scratch_operands = 0 : i64, tpu.core_type = #tpu.core_type<tc>, window_params = [{transform_indices = @transform_0, window_bounds = array<i64: 1, 8, 4>}, {pipeline_mode = #tpu.pipeline_mode<synchronous>, transform_indices = @transform_1, window_bounds = array<i64: 12, 32>}, {pipeline_mode = #tpu.pipeline_mode<synchronous>, transform_indices = @transform_2, window_bounds = array<i64: 1, 32>}, {pipeline_mode = #tpu.pipeline_mode<synchronous>, transform_indices = @transform_3, window_bounds = array<i64: 96, 32>}, {pipeline_mode = #tpu.pipeline_mode<synchronous>, transform_indices = @transform_4, window_bounds = array<i64: 1, 32>}, {transform_indices = @transform_5, window_bounds = array<i64: 1, 12, 32>}]} {
    %c0 = arith.constant 0 : index
    %c0_0 = arith.constant 0 : index
    %0 = vector.load %arg2[%c0, %c0_0] : memref<12x32xbf16, #tpu.memory_space<vmem>>, vector<12x32xbf16>
    %c0_1 = arith.constant 0 : index
    %c0_2 = arith.constant 0 : index
    %1 = vector.load %arg4[%c0_1, %c0_2] : memref<96x32xbf16, #tpu.memory_space<vmem>>, vector<96x32xbf16>
    %c0_3 = arith.constant 0 : index
    %c0_4 = arith.constant 0 : index
    %2 = vector.load %arg3[%c0_3, %c0_4] : memref<1x32xf32, #tpu.memory_space<vmem>>, vector<1x32xf32>
    %c0_5 = arith.constant 0 : index
    %c0_6 = arith.constant 0 : index
    %3 = vector.load %arg5[%c0_5, %c0_6] : memref<1x32xf32, #tpu.memory_space<vmem>>, vector<1x32xf32>
    %c0_7 = arith.constant 0 : index
    %c0_8 = arith.constant 0 : index
    %c0_9 = arith.constant 0 : index
    %4 = vector.load %arg1[%c0_7, %c0_8, %c0_9] : memref<1x8x4xbf16, #tpu.memory_space<vmem>>, vector<1x8x4xbf16>
    %5 = vector.shape_cast %4 : vector<1x8x4xbf16> to vector<8x4xbf16>
    %cst = arith.constant 0.000000e+00 : bf16
    %6 = vector.broadcast %cst : bf16 to vector<2x4xbf16>
    %7 = tpu.concatenate %6, %5, %6 in 0 : vector<2x4xbf16>, vector<8x4xbf16>, vector<2x4xbf16> -> vector<12x4xbf16>
    %8 = vector.extract_strided_slice %7 {offsets = [0, 0], sizes = [10, 4], strides = [1, 1]} : vector<12x4xbf16> to vector<10x4xbf16>
    %9 = vector.extract_strided_slice %7 {offsets = [1, 0], sizes = [10, 4], strides = [1, 1]} : vector<12x4xbf16> to vector<10x4xbf16>
    %10 = vector.extract_strided_slice %7 {offsets = [2, 0], sizes = [10, 4], strides = [1, 1]} : vector<12x4xbf16> to vector<10x4xbf16>
    %11 = tpu.concatenate %8, %9, %10 in 1 : vector<10x4xbf16>, vector<10x4xbf16>, vector<10x4xbf16> -> vector<10x12xbf16>
    %cst_10 = arith.constant dense<0.000000e+00> : vector<10x32xf32>
    %12 = tpu.matmul %11, %0, %cst_10 {dimension_numbers = #tpu.dot_dimension_numbers<[1], [0], [0], [1], [0, 0, 1, 1], [], []>} : vector<10x12xbf16>, vector<12x32xbf16>, vector<10x32xf32> -> vector<10x32xf32>
    %13 = vector.broadcast %2 : vector<1x32xf32> to vector<10x32xf32>
    %14 = arith.addf %12, %13 : vector<10x32xf32>
    %cst_11 = arith.constant 0.000000e+00 : f32
    %15 = vector.broadcast %cst_11 : f32 to vector<10x32xf32>
    %16 = arith.maximumf %14, %15 : vector<10x32xf32>
    %17 = arith.truncf %16 : vector<10x32xf32> to vector<10x32xbf16>
    %cst_12 = arith.constant 0.000000e+00 : bf16
    %18 = vector.broadcast %cst_12 : bf16 to vector<2x32xbf16>
    %19 = tpu.concatenate %18, %17, %18 in 0 : vector<2x32xbf16>, vector<10x32xbf16>, vector<2x32xbf16> -> vector<14x32xbf16>
    %20 = vector.extract_strided_slice %19 {offsets = [0, 0], sizes = [12, 32], strides = [1, 1]} : vector<14x32xbf16> to vector<12x32xbf16>
    %21 = vector.extract_strided_slice %19 {offsets = [1, 0], sizes = [12, 32], strides = [1, 1]} : vector<14x32xbf16> to vector<12x32xbf16>
    %22 = vector.extract_strided_slice %19 {offsets = [2, 0], sizes = [12, 32], strides = [1, 1]} : vector<14x32xbf16> to vector<12x32xbf16>
    %23 = tpu.concatenate %20, %21, %22 in 1 : vector<12x32xbf16>, vector<12x32xbf16>, vector<12x32xbf16> -> vector<12x96xbf16>
    %cst_13 = arith.constant dense<0.000000e+00> : vector<12x32xf32>
    %24 = tpu.matmul %23, %1, %cst_13 {dimension_numbers = #tpu.dot_dimension_numbers<[1], [0], [0], [1], [0, 0, 1, 1], [], []>} : vector<12x96xbf16>, vector<96x32xbf16>, vector<12x32xf32> -> vector<12x32xf32>
    %25 = vector.broadcast %3 : vector<1x32xf32> to vector<12x32xf32>
    %26 = arith.addf %24, %25 : vector<12x32xf32>
    %c0_14 = arith.constant 0 : index
    %c0_15 = arith.constant 0 : index
    %c0_16 = arith.constant 0 : index
    %27 = vector.load %arg6[%c0_14, %c0_15, %c0_16] : memref<1x12x32xf32, #tpu.memory_space<vmem>>, vector<1x12x32xf32>
    %28 = vector.shape_cast %27 : vector<1x12x32xf32> to vector<12x32xf32>
    %29 = vector.shape_cast %26 : vector<12x32xf32> to vector<1x12x32xf32>
    tpu.vector_store %arg6[%c0_14, %c0_15, %c0_16], %29 {strides = array<i32>} : memref<1x12x32xf32, #tpu.memory_space<vmem>>, vector<1x12x32xf32>,
    return
  }
  func.func @transform_0(%arg0: i32) -> (i32, i32, i32) {
    %c0_i32 = arith.constant 0 : i32
    %c0_i32_0 = arith.constant 0 : i32
    %c0_i32_1 = arith.constant 0 : i32
    return %arg0, %c0_i32, %c0_i32_0 : i32, i32, i32
  }
  func.func @transform_1(%arg0: i32) -> (i32, i32) {
    %c0_i32 = arith.constant 0 : i32
    %c0_i32_0 = arith.constant 0 : i32
    %c0_i32_1 = arith.constant 0 : i32
    return %c0_i32, %c0_i32_0 : i32, i32
  }
  func.func @transform_2(%arg0: i32) -> (i32, i32) {
    %c0_i32 = arith.constant 0 : i32
    %c0_i32_0 = arith.constant 0 : i32
    %c0_i32_1 = arith.constant 0 : i32
    return %c0_i32, %c0_i32_0 : i32, i32
  }
  func.func @transform_3(%arg0: i32) -> (i32, i32) {
    %c0_i32 = arith.constant 0 : i32
    %c0_i32_0 = arith.constant 0 : i32
    %c0_i32_1 = arith.constant 0 : i32
    return %c0_i32, %c0_i32_0 : i32, i32
  }
  func.func @transform_4(%arg0: i32) -> (i32, i32) {
    %c0_i32 = arith.constant 0 : i32
    %c0_i32_0 = arith.constant 0 : i32
    %c0_i32_1 = arith.constant 0 : i32
    return %c0_i32, %c0_i32_0 : i32, i32
  }
  func.func @transform_5(%arg0: i32) -> (i32, i32, i32) {
    %c0_i32 = arith.constant 0 : i32
    %c0_i32_0 = arith.constant 0 : i32
    %c0_i32_1 = arith.constant 0 : i32
    return %arg0, %c0_i32, %c0_i32_0 : i32, i32, i32
  }
}

</mosaic_0001>

<llo_original>
// kernel: tpu_custom_call.1
$region0: #{tpu_custom_call.1}
  #allocation0 [shape = 'u32[]', space=smem, size = 0x4, offset = 0x4, fixed_abs, tag = 'smem constant byte address 0x4 - core index']
  #allocation1 [shape = 'u32[144,128]{1,0:T(1,128)}', space=vmem, size = 0x12000, scoped, tag = 'internal scratch']
  %s0 = inlined_call_operand.vmem [shape: bf16[2,8,4], index: 0, kind: input, shape index: {}]
  %s1 = inlined_call_operand.vmem [shape: bf16[12,32], index: 1, kind: input, shape index: {}]
  %s2 = inlined_call_operand.vmem [shape: f32[1,32], index: 2, kind: input, shape index: {}]
  %s3 = inlined_call_operand.vmem [shape: bf16[96,32], index: 3, kind: input, shape index: {}]
  %s4 = inlined_call_operand.vmem [shape: f32[1,32], index: 4, kind: input, shape index: {}]
  %s5 = inlined_call_operand.vmem [shape: f32[2,12,32], index: 5, kind: output, shape index: {}]
  %s6 = sld [smem:[#allocation0]]
  $region53: #{tpu_custom_call.1} parent=0
    _
  %s8 = ssub.s32 1, %s6
  %s9 = scalar_select 0, %s8, %s6
  loop: start=0, step=1, limit=4
  $region2: #{tpu_custom_call.1} parent=0 // loop_pre_header
    _
  $region3: #{tpu_custom_call.1} parent=0 // loop_header
    %s11 = sphi 0, %s15
    %p12 = scmp.ge.s32.totalorder %s11, 4
    %s21 = sphi 0, %s23
    %s24 = sphi 0, %s21
    %s25 = sphi 0, %s24
    %s41 = sphi 0, %s25
    %s45 = sphi 0, %s45
    %s47 = sphi 0, %s45
    %s48 = sphi 0, %s47
    %s62 = sphi 0, %s48
    %s66 = sphi 0, %s66
    %s68 = sphi 0, %s66
    %s69 = sphi 0, %s68
    %s83 = sphi 0, %s69
    %s87 = sphi 0, %s87
    %s89 = sphi 0, %s87
    %s90 = sphi 0, %s89
    %s104 = sphi 0, %s90
    %s108 = sphi 0, %s108
    %s110 = sphi 0, %s108
    %s111 = sphi 0, %s110
    %s125 = sphi 0, %s111
    %s131 = sphi 0, %s133
    %s134 = sphi 0, %s131
    %s135 = sphi 0, %s134
    %s151 = sphi 0, %s135
  $region4: #{tpu_custom_call.1} parent=0 // loop_header_branch
    %14 = sbr.rel (%p12) target = $region8
  $region5: #{tpu_custom_call.1} parent=0 // loop_body
    %s16 = ssub.s32 %s11, 1
    %s17 = ssub.s32 %s11, 2
    %s18 = sadd.s32 %s11, 1
    %s19 = ssub.s32 %s11, %s18
    %p20 = scmp.eq.s32.totalorder %s19, 0
    %s22 = sadd.s32 %s21, 1
    %s23 = scalar_select %p20, %s21, %s22
    %p26 = pneg %p20
    %p27 = scmp.eq.s32.totalorder %s11, 1
    %p28 = por %p26, %p27
    %p29 = scmp.ne.s32.totalorder %s21, %s24
    %p30 = scmp.eq.s32.totalorder %s11, 0
    %p31 = por %p29, %p30
    %p32 = scmp.ne.s32.totalorder %s21, %s24
    %p33 = scmp.eq.s32.totalorder %s16, 1
    %p34 = por %p32, %p33
    %p35 = scmp.ne.s32.totalorder %s24, %s25
    %p36 = scmp.eq.s32.totalorder %s16, 0
    %p37 = por %p35, %p36
    %p38 = scmp.ne.s32.totalorder %s24, %s25
    %p39 = scmp.eq.s32.totalorder %s17, 1
    %p40 = por %p38, %p39
    %p42 = scmp.ne.s32.totalorder %s25, %s41
    %p43 = scmp.eq.s32.totalorder %s17, 0
    %p44 = por %p42, %p43
    %s46 = sadd.s32 %s45, 1
    %p49 = scmp.eq.s32.totalorder %s11, 1
    %p50 = scmp.ne.s32.totalorder %s45, %s47
    %p51 = scmp.eq.s32.totalorder %s11, 0
    %p52 = por %p50, %p51
    %p53 = scmp.ne.s32.totalorder %s45, %s47
    %p54 = scmp.eq.s32.totalorder %s16, 1
    %p55 = por %p53, %p54
    %p56 = scmp.ne.s32.totalorder %s47, %s48
    %p57 = scmp.eq.s32.totalorder %s16, 0
    %p58 = por %p56, %p57
    %p59 = scmp.ne.s32.totalorder %s47, %s48
    %p60 = scmp.eq.s32.totalorder %s17, 1
    %p61 = por %p59, %p60
    %p63 = scmp.ne.s32.totalorder %s48, %s62
    %p64 = scmp.eq.s32.totalorder %s17, 0
    %p65 = por %p63, %p64
    %s67 = sadd.s32 %s66, 1
    %p70 = scmp.eq.s32.totalorder %s11, 1
    %p71 = scmp.ne.s32.totalorder %s66, %s68
    %p72 = scmp.eq.s32.totalorder %s11, 0
    %p73 = por %p71, %p72
    %p74 = scmp.ne.s32.totalorder %s66, %s68
    %p75 = scmp.eq.s32.totalorder %s16, 1
    %p76 = por %p74, %p75
    %p77 = scmp.ne.s32.totalorder %s68, %s69
    %p78 = scmp.eq.s32.totalorder %s16, 0
    %p79 = por %p77, %p78
    %p80 = scmp.ne.s32.totalorder %s68, %s69
    %p81 = scmp.eq.s32.totalorder %s17, 1
    %p82 = por %p80, %p81
    %p84 = scmp.ne.s32.totalorder %s69, %s83
    %p85 = scmp.eq.s32.totalorder %s17, 0
    %p86 = por %p84, %p85
    %s88 = sadd.s32 %s87, 1
    %p91 = scmp.eq.s32.totalorder %s11, 1
    %p92 = scmp.ne.s32.totalorder %s87, %s89
    %p93 = scmp.eq.s32.totalorder %s11, 0
    %p94 = por %p92, %p93
    %p95 = scmp.ne.s32.totalorder %s87, %s89
    %p96 = scmp.eq.s32.totalorder %s16, 1
    %p97 = por %p95, %p96
    %p98 = scmp.ne.s32.totalorder %s89, %s90
    %p99 = scmp.eq.s32.totalorder %s16, 0
    %p100 = por %p98, %p99
    %p101 = scmp.ne.s32.totalorder %s89, %s90
    %p102 = scmp.eq.s32.totalorder %s17, 1
    %p103 = por %p101, %p102
    %p105 = scmp.ne.s32.totalorder %s90, %s104
    %p106 = scmp.eq.s32.totalorder %s17, 0
    %p107 = por %p105, %p106
    %s109 = sadd.s32 %s108, 1
    %p112 = scmp.eq.s32.totalorder %s11, 1
    %p113 = scmp.ne.s32.totalorder %s108, %s110
    %p114 = scmp.eq.s32.totalorder %s11, 0
    %p115 = por %p113, %p114
    %p116 = scmp.ne.s32.totalorder %s108, %s110
    %p117 = scmp.eq.s32.totalorder %s16, 1
    %p118 = por %p116, %p117
    %p119 = scmp.ne.s32.totalorder %s110, %s111
    %p120 = scmp.eq.s32.totalorder %s16, 0
    %p121 = por %p119, %p120
    %p122 = scmp.ne.s32.totalorder %s110, %s111
    %p123 = scmp.eq.s32.totalorder %s17, 1
    %p124 = por %p122, %p123
    %p126 = scmp.ne.s32.totalorder %s111, %s125
    %p127 = scmp.eq.s32.totalorder %s17, 0
    %p128 = por %p126, %p127
    %s129 = ssub.s32 %s11, %s18
    %p130 = scmp.eq.s32.totalorder %s129, 0
    %s132 = sadd.s32 %s131, 1
    %s133 = scalar_select %p130, %s131, %s132
    %p136 = pneg %p130
    %p137 = scmp.eq.s32.totalorder %s11, 1
    %p138 = por %p136, %p137
    %p139 = scmp.ne.s32.totalorder %s131, %s134
    %p140 = scmp.eq.s32.totalorder %s11, 0
    %p141 = por %p139, %p140
    %p142 = scmp.ne.s32.totalorder %s131, %s134
    %p143 = scmp.eq.s32.totalorder %s16, 1
    %p144 = por %p142, %p143
    %p145 = scmp.ne.s32.totalorder %s134, %s135
    %p146 = scmp.eq.s32.totalorder %s16, 0
    %p147 = por %p145, %p146
    %p148 = scmp.ne.s32.totalorder %s134, %s135
    %p149 = scmp.eq.s32.totalorder %s17, 1
    %p150 = por %p148, %p149
    %p152 = scmp.ne.s32.totalorder %s135, %s151
    %p153 = scmp.eq.s32.totalorder %s17, 0
    %p154 = por %p152, %p153
    %p155 = scmp.le.s32.totalorder 1, %s11
    %p156 = scmp.lt.s32.totalorder %s11, 3
    %p157 = pnand %p155, %p156
    %p158 = pneg %p157
    // Predicated region
    $region9: #{tpu_custom_call.1} parent=5 // pred_check
      _
    $region10: #{tpu_custom_call.1} parent=5 // pred_check_branch
      %160 = sbr.rel (%p157) target = $region12
    $region11: #{tpu_custom_call.1} parent=5 // pred_region
      %s161 = ssub.s32 %s11, 1
      // Predicated region
      $region13: #{tpu_custom_call.1} parent=11 // pred_check
        %p162 = pneg %p58
      $region14: #{tpu_custom_call.1} parent=11 // pred_check_branch
        %164 = sbr.rel (%p162) target = $region16
      $region15: #{tpu_custom_call.1} parent=11 // pred_region
        _
      $region16: #{tpu_custom_call.1} parent=11 // pred_fallthru
        _
      // Predicated region
      $region17: #{tpu_custom_call.1} parent=11 // pred_check
        %p165 = pneg %p79
      $region18: #{tpu_custom_call.1} parent=11 // pred_check_branch
        %167 = sbr.rel (%p165) target = $region20
      $region19: #{tpu_custom_call.1} parent=11 // pred_region
        _
      $region20: #{tpu_custom_call.1} parent=11 // pred_fallthru
        _
      // Predicated region
      $region21: #{tpu_custom_call.1} parent=11 // pred_check
        %p168 = pneg %p100
      $region22: #{tpu_custom_call.1} parent=11 // pred_check_branch
        %170 = sbr.rel (%p168) target = $region24
      $region23: #{tpu_custom_call.1} parent=11 // pred_region
        _
      $region24: #{tpu_custom_call.1} parent=11 // pred_fallthru
        _
      // Predicated region
      $region25: #{tpu_custom_call.1} parent=11 // pred_check
        %p171 = pneg %p121
      $region26: #{tpu_custom_call.1} parent=11 // pred_check_branch
        %173 = sbr.rel (%p171) target = $region28
      $region27: #{tpu_custom_call.1} parent=11 // pred_region
        _
      $region28: #{tpu_custom_call.1} parent=11 // pred_fallthru
        _
    $region12: #{tpu_custom_call.1} parent=5 // pred_fallthru
      _
    %p174 = scmp.lt.s32.totalorder %s11, 2
    // Predicated region
    $region29: #{tpu_custom_call.1} parent=5 // pred_check
      %p175 = pneg %p174
    $region30: #{tpu_custom_call.1} parent=5 // pred_check_branch
      %177 = sbr.rel (%p175) target = $region32
    $region31: #{tpu_custom_call.1} parent=5 // pred_region
      // Predicated region
      $region33: #{tpu_custom_call.1} parent=31 // pred_check
        %p178 = pneg %p31
      $region34: #{tpu_custom_call.1} parent=31 // pred_check_branch
        %180 = sbr.rel (%p178) target = $region36
      $region35: #{tpu_custom_call.1} parent=31 // pred_region
        %p181 = scmp.lt.s32.totalorder %s11, 1
        %s182 = scalar_select %p181, %s11, 1
        %s183 = smul.addr %s182, 4
        %s184 = scalar_lea.vmem %s0, %s183
      $region36: #{tpu_custom_call.1} parent=31 // pred_fallthru
        _
    $region32: #{tpu_custom_call.1} parent=5 // pred_fallthru
      _
    %p185 = scmp.le.s32.totalorder 1, %s11
    %p186 = scmp.lt.s32.totalorder %s11, 3
    %p187 = pnand %p185, %p186
    %p188 = pneg %p187
    // Predicated region
    $region37: #{tpu_custom_call.1} parent=5 // pred_check
      _
    $region38: #{tpu_custom_call.1} parent=5 // pred_check_branch
      %190 = sbr.rel (%p187) target = $region40
    $region39: #{tpu_custom_call.1} parent=5 // pred_region
      %s191 = ssub.s32 %s11, 1
      %p192 = scmp.lt.s32.totalorder %s16, 1
      %s193 = scalar_select %p192, %s16, 1
      %s194 = smul.addr %s193, 4
      %s195 = scalar_lea.vmem %s0, %s194
      %p196 = pneg %p37
      %p197 = pneg %p34
      %p198 = pneg %p58
      %p199 = pneg %p55
      %p200 = pneg %p79
      %p201 = pneg %p76
      %p202 = pneg %p100
      %p203 = pneg %p97
      %p204 = pneg %p121
      %p205 = pneg %p118
      %p206 = pneg %p147
      %p207 = pneg %p144
      %p208 = scmp.lt.s32.totalorder %s16, 1
      %s209 = scalar_select %p208, %s16, 1
      %s210 = smul.addr %s209, 2
      %s211 = smul.addr %s210, 8
      %s212 = scalar_lea.vmem %s5, %s211
      %p213 = scmp.lt.s32.totalorder %s16, 1
      %s214 = scalar_select %p213, %s16, 1
      %s215 = smul.addr %s214, 4
      %s216 = scalar_lea.vmem %s0, %s215
      %p217 = scmp.lt.s32.totalorder %s16, 1
      %s218 = scalar_select %p217, %s16, 1
      %s219 = smul.addr %s218, 2
      %s220 = smul.addr %s219, 8
      %s221 = scalar_lea.vmem %s5, %s220
      %v223 = vld [vmem:[%s1] sm:$0xf]
      %v224 = vld [vmem:[%s1 + $0x4] sm:$0x3]
      %v225 = vld [vmem:[%s3] sm:$0xf]
      %v226 = vld [vmem:[%s3 + $0x4] sm:$0xf]
      %v227 = vld [vmem:[%s3 + $0x8] sm:$0xf]
      %v228 = vld [vmem:[%s3 + $0xc] sm:$0xf]
      %v229 = vld [vmem:[%s3 + $0x10] sm:$0xf]
      %v230 = vld [vmem:[%s3 + $0x14] sm:$0xf]
      %v231 = vld [vmem:[%s3 + $0x18] sm:$0xf]
      %v232 = vld [vmem:[%s3 + $0x1c] sm:$0xf]
      %v233 = vld [vmem:[%s3 + $0x20] sm:$0xf]
      %v234 = vld [vmem:[%s3 + $0x24] sm:$0xf]
      %v235 = vld [vmem:[%s3 + $0x28] sm:$0xf]
      %v236 = vld [vmem:[%s3 + $0x2c] sm:$0xf]
      %v237 = vld [vmem:[%s2] sm:$0x1]
      %v238 = vld [vmem:[%s4] sm:$0x1]
      %v239 = vld [vmem:[%s216] sm:$0xf]
      %v241 = vunpack.c.l.b16 %v239
      %v242 = vpack.c.b16 %v241, %v241
      %v243 = vrot.slane %v242, 7
      %vm244 = vcmask 1040384
      %v247 = vsel %vm244, 0, %v243
      %vm248 = vcmask 1044480
      %v249 = vsel %vm248, %v247, 0
      %v250 = vshrl.u32 %v249, 16
      %v252 = vshll.u32 %v249, 16
      %v254 = vrot.slane %v252, 1
      %v255 = vor.u32 %v250, %v254
      %256 = vrot.lane.b32.xlu0 %v255, 4
      %v257 = vpop.permute.xlu0 %256
      %v259 = vrot.slane %v249, 1
      %260 = vrot.lane.b32.xlu0 %v259, 8
      %v261 = vpop.permute.xlu0 %260
      %vm262 = vcmask 31744
      %v264 = vsel %vm262, %v249, %v257
      %vm265 = vcmask 64512
      %v267 = vsel %vm265, %v264, %v261
      %v269 = vlaneseq
      %v270 = vshrl.u32 %v269, 7
      %v271 = vsub.s32 0, %v270
      %v272 = vrot.slane %v237, %v271
      %v276 = vunpack.c.l.b16 %v223
      %v277 = vunpack.c.l.b16 %v224
      %v278 = vpack.c.b16 %v277, %v276
      %vm279 = vcmask 97280
      %v280 = vsel %vm279, %v267, 0
      %vm282 = vcmask 1045504
      %v284 = vsel %vm282, %v278, 0
      %286 = vmatprep.subr.bf16.mxu0 0
      %287 = vmatpush1.bf16.msra.mxu0 %v284
      %288 = vmatprep.subr.bf16.mxu0 0
      %289 = vmatpush1.bf16.msra.mxu0 0
      %290 = vmatprep.subr.bf16.mxu0 0
      %291 = vmatpush1.bf16.msra.mxu0 0
      %292 = vmatprep.subr.bf16.mxu0 0
      %293 = vmatpush1.bf16.msra.mxu0 0
      %294 = vmatprep.subr.bf16.mxu0 0
      %295 = vmatpush1.bf16.msra.mxu0 0
      %296 = vmatprep.subr.bf16.mxu0 0
      %297 = vmatpush1.bf16.msra.mxu0 0
      %298 = vmatprep.subr.bf16.mxu0 0
      %299 = vmatpush1.bf16.msra.mxu0 0
      %300 = vmatprep.subr.bf16.mxu0 0
      %301 = vmatpush1.bf16.msra.mxu0 0
      %302 = vmatprep.subr.bf16.mxu0 0
      %303 = vmatpush1.bf16.msra.mxu0 0
      %304 = vmatprep.subr.bf16.mxu0 0
      %305 = vmatpush1.bf16.msra.mxu0 0
      %306 = vmatprep.subr.bf16.mxu0 0
      %307 = vmatpush1.bf16.msra.mxu0 0
      %308 = vmatprep.subr.bf16.mxu0 0
      %309 = vmatpush1.bf16.msra.mxu0 0
      %310 = vmatprep.subr.bf16.mxu0 0
      %311 = vmatpush1.bf16.msra.mxu0 0
      %312 = vmatprep.subr.bf16.mxu0 0
      %313 = vmatpush1.bf16.msra.mxu0 0
      %314 = vmatprep.subr.bf16.mxu0 0
      %315 = vmatpush1.bf16.msra.mxu0 0
      %316 = vmatprep.subr.bf16.mxu0 0
      %317 = vmatpush1.bf16.msra.mxu0 0
      %318 = vmatprep.mubr.bf16.mxu0 0
      %319 = vmatmul.mubr.bf16.gmra.mrb[0].mxu0 %v280
      %v320 = vpop.f32.mrb[0].mxu0
      %v321 = vadd.f32 %v272, %v320
      %v322 = vpop.f32.mrb[0].mxu0
      %v323 = vpop.f32.mrb[0].mxu0
      %v324 = vadd.f32 %v272, %v323
      %v325 = vpop.f32.mrb[0].mxu0
      %326 = vdwg.mxu0
      %v327 = vmax.f32 %v321, 0.0
      %v328 = vmax.f32 %v324, 0.0
      %v329 = vpack.c.bf16 %v328, %v327
      %v331 = vrot.slane %v329, 7
      %v333 = vsel %vm244, 0, %v331
      %v334 = vsel %vm282, %v333, 0
      %v335 = vshrl.u32 %v334, 16
      %v337 = vshll.u32 %v334, 16
      %v339 = vrot.slane %v337, 1
      %v340 = vor.u32 %v335, %v339
      %341 = vrot.lane.b32.xlu0 %v340, 32
      %v342 = vpop.permute.xlu0 %341
      %v344 = vrot.slane %v334, 1
      %345 = vrot.lane.b32.xlu0 %v344, 64
      %v346 = vpop.permute.xlu0 %345
      %vm347 = vcmask 261120
      %v349 = vsel %vm347, %v334, %v342
      %vm350 = vcmask 523264
      %v352 = vsel %vm350, %v349, %v346
      %v354 = vlaneseq
      %v355 = vshrl.u32 %v354, 7
      %v356 = vsub.s32 0, %v355
      %v357 = vrot.slane %v238, %v356
      %v371 = vunpack.c.l.b16 %v225
      %v372 = vunpack.c.l.b16 %v226
      %v373 = vunpack.c.l.b16 %v227
      %v374 = vunpack.c.l.b16 %v228
      %v375 = vunpack.c.l.b16 %v229
      %v376 = vunpack.c.l.b16 %v230
      %v377 = vunpack.c.l.b16 %v231
      %v378 = vunpack.c.l.b16 %v232
      %v379 = vunpack.c.l.b16 %v233
      %v380 = vunpack.c.l.b16 %v234
      %v381 = vunpack.c.l.b16 %v235
      %v382 = vunpack.c.l.b16 %v236
      %v383 = vpack.c.b16 %v372, %v371
      %v384 = vpack.c.b16 %v374, %v373
      %v385 = vpack.c.b16 %v376, %v375
      %v386 = vpack.c.b16 %v378, %v377
      %v387 = vpack.c.b16 %v380, %v379
      %v388 = vpack.c.b16 %v382, %v381
      %vm395 = vcmask 785408
      %v396 = vsel %vm395, %v352, 0
      %398 = vmatprep.subr.bf16.mxu0 0
      %399 = vmatpush1.bf16.msra.mxu0 %v383
      %400 = vmatprep.subr.bf16.mxu0 0
      %401 = vmatpush1.bf16.msra.mxu0 %v384
      %402 = vmatprep.subr.bf16.mxu0 0
      %403 = vmatpush1.bf16.msra.mxu0 %v385
      %404 = vmatprep.subr.bf16.mxu0 0
      %405 = vmatpush1.bf16.msra.mxu0 %v386
      %406 = vmatprep.subr.bf16.mxu0 0
      %407 = vmatpush1.bf16.msra.mxu0 %v387
      %408 = vmatprep.subr.bf16.mxu0 0
      %409 = vmatpush1.bf16.msra.mxu0 %v388
      %410 = vmatprep.subr.bf16.mxu0 0
      %411 = vmatpush1.bf16.msra.mxu0 0
      %412 = vmatprep.subr.bf16.mxu0 0
      %413 = vmatpush1.bf16.msra.mxu0 0
      %414 = vmatprep.subr.bf16.mxu0 0
      %415 = vmatpush1.bf16.msra.mxu0 0
      %416 = vmatprep.subr.bf16.mxu0 0
      %417 = vmatpush1.bf16.msra.mxu0 0
      %418 = vmatprep.subr.bf16.mxu0 0
      %419 = vmatpush1.bf16.msra.mxu0 0
      %420 = vmatprep.subr.bf16.mxu0 0
      %421 = vmatpush1.bf16.msra.mxu0 0
      %422 = vmatprep.subr.bf16.mxu0 0
      %423 = vmatpush1.bf16.msra.mxu0 0
      %424 = vmatprep.subr.bf16.mxu0 0
      %425 = vmatpush1.bf16.msra.mxu0 0
      %426 = vmatprep.subr.bf16.mxu0 0
      %427 = vmatpush1.bf16.msra.mxu0 0
      %428 = vmatprep.subr.bf16.mxu0 0
      %429 = vmatpush1.bf16.msra.mxu0 0
      %430 = vmatprep.mubr.bf16.mxu0 0
      %431 = vmatmul.mubr.bf16.gmra.mrb[0].mxu0 %v396
      %v432 = vpop.f32.mrb[0].mxu0
      %v433 = vadd.f32 %v357, %v432
      %v434 = vpop.f32.mrb[0].mxu0
      %v435 = vpop.f32.mrb[0].mxu0
      %v436 = vadd.f32 %v357, %v435
      %v437 = vpop.f32.mrb[0].mxu0
      %438 = vdwg.mxu0
      %439 = vst.msk [vmem:[%s221] sm:$0xff] %vm347, %v433
      %vm440 = vcmask 257024
      %441 = vst.msk [vmem:[%s221 + $0x8] sm:$0xf] %vm440, %v436
      %p442 = scmp.lt.s32.totalorder %s16, 1
      %s443 = scalar_select %p442, %s16, 1
      %s444 = smul.addr %s443, 2
      %s445 = smul.addr %s444, 8
      %s446 = scalar_lea.vmem %s5, %s445
      // Predicated region
      $region41: #{tpu_custom_call.1} parent=39 // pred_check
        %p447 = pneg %p144
      $region42: #{tpu_custom_call.1} parent=39 // pred_check_branch
        %449 = sbr.rel (%p447) target = $region44
      $region43: #{tpu_custom_call.1} parent=39 // pred_region
        _
      $region44: #{tpu_custom_call.1} parent=39 // pred_fallthru
        _
    $region40: #{tpu_custom_call.1} parent=5 // pred_fallthru
      _
    %p450 = scmp.le.s32.totalorder 2, %s11
    // Predicated region
    $region45: #{tpu_custom_call.1} parent=5 // pred_check
      %p451 = pneg %p450
    $region46: #{tpu_custom_call.1} parent=5 // pred_check_branch
      %453 = sbr.rel (%p451) target = $region48
    $region47: #{tpu_custom_call.1} parent=5 // pred_region
      %s454 = ssub.s32 %s11, 2
      // Predicated region
      $region49: #{tpu_custom_call.1} parent=47 // pred_check
        %p455 = pneg %p150
      $region50: #{tpu_custom_call.1} parent=47 // pred_check_branch
        %457 = sbr.rel (%p455) target = $region52
      $region51: #{tpu_custom_call.1} parent=47 // pred_region
        %p458 = scmp.lt.s32.totalorder %s17, 1
        %s459 = scalar_select %p458, %s17, 1
        %s460 = smul.addr %s459, 2
        %s461 = smul.addr %s460, 8
        %s462 = scalar_lea.vmem %s5, %s461
      $region52: #{tpu_custom_call.1} parent=47 // pred_fallthru
        _
    $region48: #{tpu_custom_call.1} parent=5 // pred_fallthru
      _
  $region6: #{tpu_custom_call.1} parent=0 // loop_footer
    %s15 = sadd.s32 1, %s11
  $region7: #{tpu_custom_call.1} parent=0 // loop_footer_branch
    %10 = sbr.rel target = $region3
  $region8: #{tpu_custom_call.1} parent=0 // loop_exit
    _

</llo_original>
